<compile_context>
chip_gen: v7x
topology: tpu7x:2x2x1
jax: 0.10.0
libtpu: 0.0.40
codegen_flags: <defaults>
</compile_context>

<pallas_src>
import functools

import jax
import jax.numpy as jnp
from jax.experimental import pallas as pl
from jax.experimental.pallas import tpu as pltpu

BN_EPS = 1e-5


def _elu(a):
    # ELU(alpha=1); the exp argument is clamped so the unselected branch never
    # produces inf for large positive activations.
    return jnp.where(a > 0, a, jnp.exp(jnp.minimum(a, 0.0)) - 1.0)


def _round_up(x, m):
    return (x + m - 1) // m * m


def _pad_axis(a, axis, new_size):
    pad = [(0, 0)] * a.ndim
    pad[axis] = (0, new_size - a.shape[axis])
    return jnp.pad(a, pad)


# ---------------------------------------------------------------------------
# Pallas kernel: fused upsample-GEMM + channel concat + DoubleConv
# (3x3 conv + folded BN + ELU, twice) in a lane-dense (C, nb*H*W) layout.
# ---------------------------------------------------------------------------
def _up_double_conv_kernel(x2_ref, x1_ref, ut_ref, masks_ref, w1_ref, b1_ref,
                           w2_ref, b2_ref, o_ref, *, nb, H, W):
    HW = H * W
    N = nb * HW

    # Fused bilinear x2 upsample (+ asymmetric pad) of x1: one
    # (C1, H1*W1) @ (H1*W1, H*W) GEMM per image against a constant matrix.
    ut = ut_ref[...]                                            # bf16
    x1u = [jnp.dot(x1_ref[i], ut, preferred_element_type=jnp.float32)
           for i in range(nb)]                                  # (C1p, HW) f32

    # Channel concat [x2 ; up(x1)] per image, then fold the nb images of this
    # grid step into the lane axis -> one lane-dense (Cin, nb*HW) slab.
    cols = [jnp.concatenate([x2_ref[i].astype(jnp.float32), x1u[i]], axis=0)
            for i in range(nb)]
    x = cols[0] if nb == 1 else jnp.concatenate(cols, axis=1)   # (Cin, N) f32

    # Tap offsets in flattened (y*W + x) coordinates, tap-major order matching
    # the weight matrix layout built by _weight_as_matrix.
    offsets = [oy * W + ox for oy in (-1, 0, 1) for ox in (-1, 0, 1)]

    def im2col(v):
        # v: (C, N) f32 -> (9*C, N) bf16 register value (no VMEM round-trip).
        pieces = []
        for t, off in enumerate(offsets):
            if off == 0:
                piece = v
            else:
                piece = pltpu.roll(v, (-off) % N, 1)            # lane rotate (XLU)
                piece = piece * masks_ref[t:t + 1, :]           # SAME zero padding
            pieces.append(piece)
        return jnp.concatenate(pieces, axis=0).astype(jnp.bfloat16)

    # conv1 (+ folded BN) + ELU: one (Cmid, 9*Cin) @ (9*Cin, N) bf16 GEMM.
    a1 = jnp.dot(w1_ref[...], im2col(x), preferred_element_type=jnp.float32)
    h1 = _elu(a1 + b1_ref[...])                                 # (Cmid, N) f32

    # conv2 (+ folded BN) + ELU: one (Cout, 9*Cmid) @ (9*Cmid, N) bf16 GEMM.
    a2 = jnp.dot(w2_ref[...], im2col(h1), preferred_element_type=jnp.float32)
    out = _elu(a2 + b2_ref[...])                                # (Cout, N) f32

    # Un-fold the lane axis back into per-image, lane-dense bf16 output blocks.
    for i in range(nb):
        o_ref[i] = out[:, i * HW:(i + 1) * HW].astype(o_ref.dtype)


def _up_double_conv_pallas(x2f, x1f, ut, masks, w1m, b1, w2m, b2, *, H, W, nb):
    B, C2p, HW = x2f.shape
    _, C1p, HW1 = x1f.shape
    Cmid = w1m.shape[0]
    Cout = w2m.shape[0]
    G = B // nb
    N = nb * HW
    assert HW == H * W and B == G * nb and masks.shape == (9, N)

    kernel = functools.partial(_up_double_conv_kernel, nb=nb, H=H, W=W)
    return pl.pallas_call(
        kernel,
        out_shape=jax.ShapeDtypeStruct((B, Cout, HW), jnp.bfloat16),
        grid_spec=pltpu.PrefetchScalarGridSpec(
            num_scalar_prefetch=0,
            grid=(G,),
            in_specs=[
                pl.BlockSpec((nb, C2p, HW), lambda g: (g, 0, 0)),
                pl.BlockSpec((nb, C1p, HW1), lambda g: (g, 0, 0)),
                pl.BlockSpec((HW1, HW), lambda g: (0, 0)),
                pl.BlockSpec((9, N), lambda g: (0, 0)),
                pl.BlockSpec((Cmid, w1m.shape[1]), lambda g: (0, 0)),
                pl.BlockSpec((Cmid, 1), lambda g: (0, 0)),
                pl.BlockSpec((Cout, w2m.shape[1]), lambda g: (0, 0)),
                pl.BlockSpec((Cout, 1), lambda g: (0, 0)),
            ],
            out_specs=pl.BlockSpec((nb, Cout, HW), lambda g: (g, 0, 0)),
        ),
        compiler_params=pltpu.CompilerParams(
            dimension_semantics=("parallel",),
            vmem_limit_bytes=32 * 1024 * 1024),
    )(x2f, x1f, ut, masks, w1m, b1, w2m, b2)


# ---------------------------------------------------------------------------
# Wrapper-side constant construction (BN folding, weight matrices, bilinear
# interpolation matrix, SAME-padding tap masks).
# ---------------------------------------------------------------------------
def _fold_bn(conv_w, conv_b, gamma, beta, mean, var, eps=BN_EPS):
    # conv_w: (Cout, Cin, 3, 3) OIHW; eval-mode BN folding.
    scale = gamma / jnp.sqrt(var + eps)
    w_eff = conv_w * scale[:, None, None, None]
    shift = (conv_b - mean) * scale + beta
    return w_eff.astype(jnp.float32), shift.astype(jnp.float32)


def _weight_as_matrix(w_oihw):
    # (Cout, Cin, ky, kx) -> (Cout, ky, kx, Cin) -> (Cout, 9*Cin); rows are
    # tap-major / channel-minor, matching the kernel's im2col patch layout.
    Cout, Cin = w_oihw.shape[:2]
    return jnp.transpose(w_oihw, (0, 2, 3, 1)).reshape(Cout, 9 * Cin)


def _tap_boundary_masks(H, W):
    # (9, H*W) {0,1}: tap (oy, ox) valid at (y, x) iff (y+oy, x+ox) is inside
    # the image (reproduces zero padding, incl. suppression of roll wraps).
    y = jnp.arange(H * W, dtype=jnp.int32) // W
    x = jnp.arange(H * W, dtype=jnp.int32) % W
    rows = []
    for oy in (-1, 0, 1):
        for ox in (-1, 0, 1):
            valid = ((y + oy >= 0) & (y + oy < H) & (x + ox >= 0) & (x + ox < W))
            rows.append(valid.astype(jnp.float32))
    return jnp.stack(rows, axis=0)


def _bilinear_coords(n_in, n_out):
    # PyTorch bilinear, align_corners=False, scale factor 2.
    j = jnp.arange(n_out, dtype=jnp.float32)
    src = jnp.maximum((j + 0.5) / 2.0 - 0.5, 0.0)
    i0 = jnp.clip(jnp.floor(src).astype(jnp.int32), 0, n_in - 1)
    i1 = jnp.clip(i0 + 1, 0, n_in - 1)
    frac = src - i0.astype(jnp.float32)
    return i0, i1, frac


def _axis_interp_matrix(n_in, n_out, pad_lo):
    # (n_out, n_in): rows [pad_lo, pad_lo + 2*n_in) carry the bilinear x2
    # weights; the remaining rows are the zero padding applied by F.pad.
    n_up = 2 * n_in
    i0, i1, f = _bilinear_coords(n_in, n_up)
    rows = pad_lo + jnp.arange(n_up)
    m = jnp.zeros((n_out, n_in), jnp.float32)
    m = m.at[rows, i0].add(1.0 - f)
    m = m.at[rows, i1].add(f)
    return m


def _upsample_pad_matrix_t(H1, W1, H2, W2):
    # Returns U^T of shape (H1*W1, H2*W2) such that  x1u_flat = x1_flat @ U^T
    # is the bilinear x2 upsample of x1 followed by the asymmetric pad.
    My = _axis_interp_matrix(H1, H2, (H2 - 2 * H1) // 2)     # (H2, H1)
    Mx = _axis_interp_matrix(W1, W2, (W2 - 2 * W1) // 2)     # (W2, W1)
    U = jnp.einsum("ab,cd->acbd", My, Mx).reshape(H2 * W2, H1 * W1)
    return U.T


def up_forward(x1, x2, params):
    """x1, x2 in NCHW (PyTorch convention); returns NCHW bf16 output."""
    B, C2, H, W = x2.shape
    _, C1, H1, W1 = x1.shape
    diffY, diffX = H - 2 * H1, W - 2 * W1
    assert x1.shape[0] == B and diffY >= 0 and diffX >= 0

    # Channel counts padded to multiples of 8 so every in-kernel sublane concat
    # is tile aligned; padded channels / weight columns are zero.
    C2p, C1p = _round_up(C2, 8), _round_up(C1, 8)
    x2f = _pad_axis(x2, 1, C2p).reshape(B, C2p, H * W).astype(jnp.bfloat16)
    x1f = _pad_axis(x1, 1, C1p).reshape(B, C1p, H1 * W1).astype(jnp.bfloat16)

    # Fold eval-mode BN into the convs, pad channels, flatten to GEMM matrices.
    w1_oihw, s1 = _fold_bn(params["conv1_w"], params["conv1_b"], *params["bn1"])
    w2_oihw, s2 = _fold_bn(params["conv2_w"], params["conv2_b"], *params["bn2"])
    Cmid, Cout = w1_oihw.shape[0], w2_oihw.shape[0]
    Cmidp = _round_up(Cmid, 8)
    w1_pad = jnp.concatenate([_pad_axis(w1_oihw[:, :C2], 1, C2p),
                              _pad_axis(w1_oihw[:, C2:], 1, C1p)], axis=1)
    w1_pad = _pad_axis(w1_pad, 0, Cmidp)
    s1 = _pad_axis(s1, 0, Cmidp)
    w2_pad = _pad_axis(w2_oihw, 1, Cmidp)
    w1m = _weight_as_matrix(w1_pad).astype(jnp.bfloat16)
    w2m = _weight_as_matrix(w2_pad).astype(jnp.bfloat16)

    # 2-wide "parallel" grid when the batch allows (keeps both v7x TensorCores
    # busy); the remaining batch elements are folded into the GEMM lane axis.
    G = 2 if (B % 2 == 0 and B >= 2) else 1
    nb = B // G

    # Constant bilinear-upsample(+pad) matrix (weights are exact in bf16) and
    # SAME-padding tap masks, tiled over the nb lane-folded images.
    ut = _upsample_pad_matrix_t(H1, W1, H, W).astype(jnp.bfloat16)
    masks = jnp.tile(_tap_boundary_masks(H, W), (1, nb))

    out = _up_double_conv_pallas(
        x2f, x1f, ut, masks, w1m, s1.reshape(-1, 1), w2m, s2.reshape(-1, 1),
        H=H, W=W, nb=nb)
    return out.reshape(B, Cout, H, W)


# ---------------------------------------------------------------------------
# Pure-JAX reference (mirrors the kernel's bf16 ingest / f32 accumulation).
# ---------------------------------------------------------------------------
def _upsample2x_bilinear_nchw(x):
    B, C, H, W = x.shape
    y0, y1, fy = _bilinear_coords(H, 2 * H)
    x0, x1i, fx = _bilinear_coords(W, 2 * W)
    rows = (x[:, :, y0, :] * (1.0 - fy)[None, None, :, None]
            + x[:, :, y1, :] * fy[None, None, :, None])
    return (rows[:, :, :, x0] * (1.0 - fx)[None, None, None, :]
            + rows[:, :, :, x1i] * fx[None, None, None, :])


def up_forward_ref(x1, x2, params):
    x1b = x1.astype(jnp.bfloat16).astype(jnp.float32)
    x2b = x2.astype(jnp.bfloat16).astype(jnp.float32)
    x1u = _upsample2x_bilinear_nchw(x1b)
    diffY = x2.shape[2] - x1u.shape[2]
    diffX = x2.shape[3] - x1u.shape[3]
    x1u = jnp.pad(x1u, ((0, 0), (0, 0),
                        (diffY // 2, diffY - diffY // 2),
                        (diffX // 2, diffX - diffX // 2)))
    x = jnp.concatenate([x2b, x1u], axis=1)

    def conv_bn_elu(h, w, b, bn):
        w_eff, shift = _fold_bn(w, b, *bn)
        y = jax.lax.conv_general_dilated(
            h.astype(jnp.bfloat16), w_eff.astype(jnp.bfloat16),
            window_strides=(1, 1), padding=((1, 1), (1, 1)),
            dimension_numbers=("NCHW", "OIHW", "NCHW"),
            preferred_element_type=jnp.float32)
        return _elu(y + shift[None, :, None, None])

    h = conv_bn_elu(x, params["conv1_w"], params["conv1_b"], params["bn1"])
    return conv_bn_elu(h, params["conv2_w"], params["conv2_b"], params["bn2"])


# ---------------------------------------------------------------------------
if __name__ == "__main__":
    key = jax.random.PRNGKey(0)
    B = 2
    C1, C2 = 4, 4            # Up(in_ch_1=4, in_ch_2=4, out_ch=8)
    out_ch = 8
    H1 = W1 = 8              # x1 spatial (bilinear x2 upsample -> 16)
    H2 = W2 = 16             # x2 spatial

    k1, k2, k3, k4, k5, k6 = jax.random.split(key, 6)
    x1 = jax.random.normal(k1, (B, C1, H1, W1), jnp.float32)
    x2 = jax.random.normal(k2, (B, C2, H2, W2), jnp.float32)

    Cin = C1 + C2
    params = {
        "conv1_w": jax.random.normal(k3, (out_ch, Cin, 3, 3), jnp.float32) * 0.1,
        "conv1_b": jax.random.normal(k4, (out_ch,), jnp.float32) * 0.1,
        # BatchNorm at PyTorch init, eval mode: gamma=1, beta=0, mean=0, var=1
        "bn1": (jnp.ones((out_ch,), jnp.float32),
                jnp.zeros((out_ch,), jnp.float32),
                jnp.zeros((out_ch,), jnp.float32),
                jnp.ones((out_ch,), jnp.float32)),
        "conv2_w": jax.random.normal(k5, (out_ch, out_ch, 3, 3), jnp.float32) * 0.1,
        "conv2_b": jax.random.normal(k6, (out_ch,), jnp.float32) * 0.1,
        "bn2": (jnp.ones((out_ch,), jnp.float32),
                jnp.zeros((out_ch,), jnp.float32),
                jnp.zeros((out_ch,), jnp.float32),
                jnp.ones((out_ch,), jnp.float32)),
    }

    out = up_forward(x1, x2, params)
    jax.block_until_ready(out)
    assert out.shape == (B, out_ch, H2, W2)

    ref = up_forward_ref(x1, x2, params)
    out_f32 = out.astype(jnp.float32)
    err = float(jnp.max(jnp.abs(out_f32 - ref)))
    assert jnp.allclose(out_f32, ref, atol=3e-2, rtol=3e-2), f"max abs err {err}"
    print("KERNEL_OK")
</pallas_src>

<mosaic_0001>
module attributes {stable_mosaic.version = 11 : i64} {
  func.func @_up_double_conv_kernel(%arg0: i32, %arg1: memref<1x8x256xbf16, #tpu.memory_space<vmem>>, %arg2: memref<1x8x64xbf16, #tpu.memory_space<vmem>>, %arg3: memref<64x256xbf16, #tpu.memory_space<vmem>>, %arg4: memref<9x256xf32, #tpu.memory_space<vmem>>, %arg5: memref<8x144xbf16, #tpu.memory_space<vmem>>, %arg6: memref<8x1xf32, #tpu.memory_space<vmem>>, %arg7: memref<8x72xbf16, #tpu.memory_space<vmem>>, %arg8: memref<8x1xf32, #tpu.memory_space<vmem>>, %arg9: memref<1x8x256xbf16, #tpu.memory_space<vmem>>) attributes {dimension_semantics = [#tpu.dimension_semantics<parallel>], iteration_bounds = array<i64: 2>, scalar_prefetch = 0 : i64, scratch_operands = 0 : i64, tpu.core_type = #tpu.core_type<tc>, window_params = [{transform_indices = @transform_0, window_bounds = array<i64: 1, 8, 256>}, {transform_indices = @transform_1, window_bounds = array<i64: 1, 8, 64>}, {pipeline_mode = #tpu.pipeline_mode<synchronous>, transform_indices = @transform_2, window_bounds = array<i64: 64, 256>}, {pipeline_mode = #tpu.pipeline_mode<synchronous>, transform_indices = @transform_3, window_bounds = array<i64: 9, 256>}, {pipeline_mode = #tpu.pipeline_mode<synchronous>, transform_indices = @transform_4, window_bounds = array<i64: 8, 144>}, {pipeline_mode = #tpu.pipeline_mode<synchronous>, transform_indices = @transform_5, window_bounds = array<i64: 8, 1>}, {pipeline_mode = #tpu.pipeline_mode<synchronous>, transform_indices = @transform_6, window_bounds = array<i64: 8, 72>}, {pipeline_mode = #tpu.pipeline_mode<synchronous>, transform_indices = @transform_7, window_bounds = array<i64: 8, 1>}, {transform_indices = @transform_8, window_bounds = array<i64: 1, 8, 256>}]} {
    %c0 = arith.constant 0 : index
    %c0_0 = arith.constant 0 : index
    %0 = vector.load %arg3[%c0, %c0_0] : memref<64x256xbf16, #tpu.memory_space<vmem>>, vector<64x256xbf16>
    %c0_1 = arith.constant 0 : index
    %c0_2 = arith.constant 0 : index
    %c0_3 = arith.constant 0 : index
    %1 = vector.load %arg2[%c0_1, %c0_2, %c0_3] : memref<1x8x64xbf16, #tpu.memory_space<vmem>>, vector<1x8x64xbf16>
    %2 = vector.shape_cast %1 : vector<1x8x64xbf16> to vector<8x64xbf16>
    %cst = arith.constant dense<0.000000e+00> : vector<8x256xf32>
    %3 = tpu.matmul %2, %0, %cst {dimension_numbers = #tpu.dot_dimension_numbers<[1], [0], [0], [1], [0, 0, 1, 1], [], []>} : vector<8x64xbf16>, vector<64x256xbf16>, vector<8x256xf32> -> vector<8x256xf32>
    %c0_4 = arith.constant 0 : index
    %c0_5 = arith.constant 0 : index
    %c0_6 = arith.constant 0 : index
    %4 = vector.load %arg1[%c0_4, %c0_5, %c0_6] : memref<1x8x256xbf16, #tpu.memory_space<vmem>>, vector<1x8x256xbf16>
    %5 = vector.shape_cast %4 : vector<1x8x256xbf16> to vector<8x256xbf16>
    %6 = arith.extf %5 : vector<8x256xbf16> to vector<8x256xf32>
    %7 = tpu.concatenate %6, %3 in 0 : vector<8x256xf32>, vector<8x256xf32> -> vector<16x256xf32>
    %c0_7 = arith.constant 0 : index
    %c0_8 = arith.constant 0 : index
    %8 = vector.load %arg5[%c0_7, %c0_8] : memref<8x144xbf16, #tpu.memory_space<vmem>>, vector<8x144xbf16>
    %c17_i32 = arith.constant 17 : i32
    %9 = tpu.dynamic_rotate %7 by %c17_i32 dim 1 : vector<16x256xf32>, i32 -> vector<16x256xf32>
    %c0_9 = arith.constant 0 : index
    %c0_10 = arith.constant 0 : index
    %10 = vector.load %arg4[%c0_9, %c0_10] : memref<9x256xf32, #tpu.memory_space<vmem>>, vector<1x256xf32>
    %11 = vector.broadcast %10 : vector<1x256xf32> to vector<16x256xf32>
    %12 = arith.mulf %9, %11 : vector<16x256xf32>
    %c16_i32 = arith.constant 16 : i32
    %13 = tpu.dynamic_rotate %7 by %c16_i32 dim 1 : vector<16x256xf32>, i32 -> vector<16x256xf32>
    %c1 = arith.constant 1 : index
    %c0_11 = arith.constant 0 : index
    %14 = vector.load %arg4[%c1, %c0_11] : memref<9x256xf32, #tpu.memory_space<vmem>>, vector<1x256xf32>
    %15 = vector.broadcast %14 : vector<1x256xf32> to vector<16x256xf32>
    %16 = arith.mulf %13, %15 : vector<16x256xf32>
    %c15_i32 = arith.constant 15 : i32
    %17 = tpu.dynamic_rotate %7 by %c15_i32 dim 1 : vector<16x256xf32>, i32 -> vector<16x256xf32>
    %c2 = arith.constant 2 : index
    %c0_12 = arith.constant 0 : index
    %18 = vector.load %arg4[%c2, %c0_12] : memref<9x256xf32, #tpu.memory_space<vmem>>, vector<1x256xf32>
    %19 = vector.broadcast %18 : vector<1x256xf32> to vector<16x256xf32>
    %20 = arith.mulf %17, %19 : vector<16x256xf32>
    %c1_i32 = arith.constant 1 : i32
    %21 = tpu.dynamic_rotate %7 by %c1_i32 dim 1 : vector<16x256xf32>, i32 -> vector<16x256xf32>
    %c3 = arith.constant 3 : index
    %c0_13 = arith.constant 0 : index
    %22 = vector.load %arg4[%c3, %c0_13] : memref<9x256xf32, #tpu.memory_space<vmem>>, vector<1x256xf32>
    %23 = vector.broadcast %22 : vector<1x256xf32> to vector<16x256xf32>
    %24 = arith.mulf %21, %23 : vector<16x256xf32>
    %c255_i32 = arith.constant 255 : i32
    %25 = tpu.dynamic_rotate %7 by %c255_i32 dim 1 : vector<16x256xf32>, i32 -> vector<16x256xf32>
    %c5 = arith.constant 5 : index
    %c0_14 = arith.constant 0 : index
    %26 = vector.load %arg4[%c5, %c0_14] : memref<9x256xf32, #tpu.memory_space<vmem>>, vector<1x256xf32>
    %27 = vector.broadcast %26 : vector<1x256xf32> to vector<16x256xf32>
    %28 = arith.mulf %25, %27 : vector<16x256xf32>
    %c241_i32 = arith.constant 241 : i32
    %29 = tpu.dynamic_rotate %7 by %c241_i32 dim 1 : vector<16x256xf32>, i32 -> vector<16x256xf32>
    %c6 = arith.constant 6 : index
    %c0_15 = arith.constant 0 : index
    %30 = vector.load %arg4[%c6, %c0_15] : memref<9x256xf32, #tpu.memory_space<vmem>>, vector<1x256xf32>
    %31 = vector.broadcast %30 : vector<1x256xf32> to vector<16x256xf32>
    %32 = arith.mulf %29, %31 : vector<16x256xf32>
    %c240_i32 = arith.constant 240 : i32
    %33 = tpu.dynamic_rotate %7 by %c240_i32 dim 1 : vector<16x256xf32>, i32 -> vector<16x256xf32>
    %c7 = arith.constant 7 : index
    %c0_16 = arith.constant 0 : index
    %34 = vector.load %arg4[%c7, %c0_16] : memref<9x256xf32, #tpu.memory_space<vmem>>, vector<1x256xf32>
    %35 = vector.broadcast %34 : vector<1x256xf32> to vector<16x256xf32>
    %36 = arith.mulf %33, %35 : vector<16x256xf32>
    %c239_i32 = arith.constant 239 : i32
    %37 = tpu.dynamic_rotate %7 by %c239_i32 dim 1 : vector<16x256xf32>, i32 -> vector<16x256xf32>
    %c8 = arith.constant 8 : index
    %c0_17 = arith.constant 0 : index
    %38 = vector.load %arg4[%c8, %c0_17] : memref<9x256xf32, #tpu.memory_space<vmem>>, vector<1x256xf32>
    %39 = vector.broadcast %38 : vector<1x256xf32> to vector<16x256xf32>
    %40 = arith.mulf %37, %39 : vector<16x256xf32>
    %41 = tpu.concatenate %12, %16, %20, %24, %7, %28, %32, %36, %40 in 0 : vector<16x256xf32>, vector<16x256xf32>, vector<16x256xf32>, vector<16x256xf32>, vector<16x256xf32>, vector<16x256xf32>, vector<16x256xf32>, vector<16x256xf32>, vector<16x256xf32> -> vector<144x256xf32>
    %42 = arith.truncf %41 : vector<144x256xf32> to vector<144x256xbf16>
    %cst_18 = arith.constant dense<0.000000e+00> : vector<8x256xf32>
    %43 = tpu.matmul %8, %42, %cst_18 {dimension_numbers = #tpu.dot_dimension_numbers<[1], [0], [0], [1], [0, 0, 1, 1], [], []>} : vector<8x144xbf16>, vector<144x256xbf16>, vector<8x256xf32> -> vector<8x256xf32>
    %c0_19 = arith.constant 0 : index
    %c0_20 = arith.constant 0 : index
    %44 = vector.load %arg6[%c0_19, %c0_20] : memref<8x1xf32, #tpu.memory_space<vmem>>, vector<8x1xf32>
    %45 = vector.broadcast %44 : vector<8x1xf32> to vector<8x256xf32>
    %46 = arith.addf %43, %45 : vector<8x256xf32>
    %cst_21 = arith.constant 0.000000e+00 : f32
    %47 = vector.broadcast %cst_21 : f32 to vector<8x256xf32>
    %48 = arith.cmpf ogt, %46, %47 : vector<8x256xf32>
    %cst_22 = arith.constant 0.000000e+00 : f32
    %49 = vector.broadcast %cst_22 : f32 to vector<8x256xf32>
    %50 = arith.minimumf %46, %49 : vector<8x256xf32>
    %51 = math.exp %50 : vector<8x256xf32>
    %cst_23 = arith.constant 1.000000e+00 : f32
    %52 = vector.broadcast %cst_23 : f32 to vector<8x256xf32>
    %53 = arith.subf %51, %52 : vector<8x256xf32>
    %54 = arith.select %48, %46, %53 : vector<8x256xi1>, vector<8x256xf32>
    %c0_24 = arith.constant 0 : index
    %c0_25 = arith.constant 0 : index
    %55 = vector.load %arg7[%c0_24, %c0_25] : memref<8x72xbf16, #tpu.memory_space<vmem>>, vector<8x72xbf16>
    %c17_i32_26 = arith.constant 17 : i32
    %56 = tpu.dynamic_rotate %54 by %c17_i32_26 dim 1 : vector<8x256xf32>, i32 -> vector<8x256xf32>
    %c0_27 = arith.constant 0 : index
    %c0_28 = arith.constant 0 : index
    %57 = vector.load %arg4[%c0_27, %c0_28] : memref<9x256xf32, #tpu.memory_space<vmem>>, vector<1x256xf32>
    %58 = vector.broadcast %57 : vector<1x256xf32> to vector<8x256xf32>
    %59 = arith.mulf %56, %58 : vector<8x256xf32>
    %c16_i32_29 = arith.constant 16 : i32
    %60 = tpu.dynamic_rotate %54 by %c16_i32_29 dim 1 : vector<8x256xf32>, i32 -> vector<8x256xf32>
    %c1_30 = arith.constant 1 : index
    %c0_31 = arith.constant 0 : index
    %61 = vector.load %arg4[%c1_30, %c0_31] : memref<9x256xf32, #tpu.memory_space<vmem>>, vector<1x256xf32>
    %62 = vector.broadcast %61 : vector<1x256xf32> to vector<8x256xf32>
    %63 = arith.mulf %60, %62 : vector<8x256xf32>
    %c15_i32_32 = arith.constant 15 : i32
    %64 = tpu.dynamic_rotate %54 by %c15_i32_32 dim 1 : vector<8x256xf32>, i32 -> vector<8x256xf32>
    %c2_33 = arith.constant 2 : index
    %c0_34 = arith.constant 0 : index
    %65 = vector.load %arg4[%c2_33, %c0_34] : memref<9x256xf32, #tpu.memory_space<vmem>>, vector<1x256xf32>
    %66 = vector.broadcast %65 : vector<1x256xf32> to vector<8x256xf32>
    %67 = arith.mulf %64, %66 : vector<8x256xf32>
    %c1_i32_35 = arith.constant 1 : i32
    %68 = tpu.dynamic_rotate %54 by %c1_i32_35 dim 1 : vector<8x256xf32>, i32 -> vector<8x256xf32>
    %c3_36 = arith.constant 3 : index
    %c0_37 = arith.constant 0 : index
    %69 = vector.load %arg4[%c3_36, %c0_37] : memref<9x256xf32, #tpu.memory_space<vmem>>, vector<1x256xf32>
    %70 = vector.broadcast %69 : vector<1x256xf32> to vector<8x256xf32>
    %71 = arith.mulf %68, %70 : vector<8x256xf32>
    %c255_i32_38 = arith.constant 255 : i32
    %72 = tpu.dynamic_rotate %54 by %c255_i32_38 dim 1 : vector<8x256xf32>, i32 -> vector<8x256xf32>
    %c5_39 = arith.constant 5 : index
    %c0_40 = arith.constant 0 : index
    %73 = vector.load %arg4[%c5_39, %c0_40] : memref<9x256xf32, #tpu.memory_space<vmem>>, vector<1x256xf32>
    %74 = vector.broadcast %73 : vector<1x256xf32> to vector<8x256xf32>
    %75 = arith.mulf %72, %74 : vector<8x256xf32>
    %c241_i32_41 = arith.constant 241 : i32
    %76 = tpu.dynamic_rotate %54 by %c241_i32_41 dim 1 : vector<8x256xf32>, i32 -> vector<8x256xf32>
    %c6_42 = arith.constant 6 : index
    %c0_43 = arith.constant 0 : index
    %77 = vector.load %arg4[%c6_42, %c0_43] : memref<9x256xf32, #tpu.memory_space<vmem>>, vector<1x256xf32>
    %78 = vector.broadcast %77 : vector<1x256xf32> to vector<8x256xf32>
    %79 = arith.mulf %76, %78 : vector<8x256xf32>
    %c240_i32_44 = arith.constant 240 : i32
    %80 = tpu.dynamic_rotate %54 by %c240_i32_44 dim 1 : vector<8x256xf32>, i32 -> vector<8x256xf32>
    %c7_45 = arith.constant 7 : index
    %c0_46 = arith.constant 0 : index
    %81 = vector.load %arg4[%c7_45, %c0_46] : memref<9x256xf32, #tpu.memory_space<vmem>>, vector<1x256xf32>
    %82 = vector.broadcast %81 : vector<1x256xf32> to vector<8x256xf32>
    %83 = arith.mulf %80, %82 : vector<8x256xf32>
    %c239_i32_47 = arith.constant 239 : i32
    %84 = tpu.dynamic_rotate %54 by %c239_i32_47 dim 1 : vector<8x256xf32>, i32 -> vector<8x256xf32>
    %c8_48 = arith.constant 8 : index
    %c0_49 = arith.constant 0 : index
    %85 = vector.load %arg4[%c8_48, %c0_49] : memref<9x256xf32, #tpu.memory_space<vmem>>, vector<1x256xf32>
    %86 = vector.broadcast %85 : vector<1x256xf32> to vector<8x256xf32>
    %87 = arith.mulf %84, %86 : vector<8x256xf32>
    %88 = tpu.concatenate %59, %63, %67, %71, %54, %75, %79, %83, %87 in 0 : vector<8x256xf32>, vector<8x256xf32>, vector<8x256xf32>, vector<8x256xf32>, vector<8x256xf32>, vector<8x256xf32>, vector<8x256xf32>, vector<8x256xf32>, vector<8x256xf32> -> vector<72x256xf32>
    %89 = arith.truncf %88 : vector<72x256xf32> to vector<72x256xbf16>
    %cst_50 = arith.constant dense<0.000000e+00> : vector<8x256xf32>
    %90 = tpu.matmul %55, %89, %cst_50 {dimension_numbers = #tpu.dot_dimension_numbers<[1], [0], [0], [1], [0, 0, 1, 1], [], []>} : vector<8x72xbf16>, vector<72x256xbf16>, vector<8x256xf32> -> vector<8x256xf32>
    %c0_51 = arith.constant 0 : index
    %c0_52 = arith.constant 0 : index
    %91 = vector.load %arg8[%c0_51, %c0_52] : memref<8x1xf32, #tpu.memory_space<vmem>>, vector<8x1xf32>
    %92 = vector.broadcast %91 : vector<8x1xf32> to vector<8x256xf32>
    %93 = arith.addf %90, %92 : vector<8x256xf32>
    %cst_53 = arith.constant 0.000000e+00 : f32
    %94 = vector.broadcast %cst_53 : f32 to vector<8x256xf32>
    %95 = arith.cmpf ogt, %93, %94 : vector<8x256xf32>
    %cst_54 = arith.constant 0.000000e+00 : f32
    %96 = vector.broadcast %cst_54 : f32 to vector<8x256xf32>
    %97 = arith.minimumf %93, %96 : vector<8x256xf32>
    %98 = math.exp %97 : vector<8x256xf32>
    %cst_55 = arith.constant 1.000000e+00 : f32
    %99 = vector.broadcast %cst_55 : f32 to vector<8x256xf32>
    %100 = arith.subf %98, %99 : vector<8x256xf32>
    %101 = arith.select %95, %93, %100 : vector<8x256xi1>, vector<8x256xf32>
    %102 = arith.truncf %101 : vector<8x256xf32> to vector<8x256xbf16>
    %c0_56 = arith.constant 0 : index
    %c0_57 = arith.constant 0 : index
    %c0_58 = arith.constant 0 : index
    %103 = vector.load %arg9[%c0_56, %c0_57, %c0_58] : memref<1x8x256xbf16, #tpu.memory_space<vmem>>, vector<1x8x256xbf16>
    %104 = vector.shape_cast %103 : vector<1x8x256xbf16> to vector<8x256xbf16>
    %105 = vector.shape_cast %102 : vector<8x256xbf16> to vector<1x8x256xbf16>
    tpu.vector_store %arg9[%c0_56, %c0_57, %c0_58], %105 {strides = array<i32>} : memref<1x8x256xbf16, #tpu.memory_space<vmem>>, vector<1x8x256xbf16>,
    return
  }
  func.func @transform_0(%arg0: i32) -> (i32, i32, i32) {
    %c0_i32 = arith.constant 0 : i32
    %c0_i32_0 = arith.constant 0 : i32
    %c0_i32_1 = arith.constant 0 : i32
    return %arg0, %c0_i32, %c0_i32_0 : i32, i32, i32
  }
  func.func @transform_1(%arg0: i32) -> (i32, i32, i32) {
    %c0_i32 = arith.constant 0 : i32
    %c0_i32_0 = arith.constant 0 : i32
    %c0_i32_1 = arith.constant 0 : i32
    return %arg0, %c0_i32, %c0_i32_0 : i32, i32, i32
  }
  func.func @transform_2(%arg0: i32) -> (i32, i32) {
    %c0_i32 = arith.constant 0 : i32
    %c0_i32_0 = arith.constant 0 : i32
    %c0_i32_1 = arith.constant 0 : i32
    return %c0_i32, %c0_i32_0 : i32, i32
  }
  func.func @transform_3(%arg0: i32) -> (i32, i32) {
    %c0_i32 = arith.constant 0 : i32
    %c0_i32_0 = arith.constant 0 : i32
    %c0_i32_1 = arith.constant 0 : i32
    return %c0_i32, %c0_i32_0 : i32, i32
  }
  func.func @transform_4(%arg0: i32) -> (i32, i32) {
    %c0_i32 = arith.constant 0 : i32
    %c0_i32_0 = arith.constant 0 : i32
    %c0_i32_1 = arith.constant 0 : i32
    return %c0_i32, %c0_i32_0 : i32, i32
  }
  func.func @transform_5(%arg0: i32) -> (i32, i32) {
    %c0_i32 = arith.constant 0 : i32
    %c0_i32_0 = arith.constant 0 : i32
    %c0_i32_1 = arith.constant 0 : i32
    return %c0_i32, %c0_i32_0 : i32, i32
  }
  func.func @transform_6(%arg0: i32) -> (i32, i32) {
    %c0_i32 = arith.constant 0 : i32
    %c0_i32_0 = arith.constant 0 : i32
    %c0_i32_1 = arith.constant 0 : i32
    return %c0_i32, %c0_i32_0 : i32, i32
  }
  func.func @transform_7(%arg0: i32) -> (i32, i32) {
    %c0_i32 = arith.constant 0 : i32
    %c0_i32_0 = arith.constant 0 : i32
    %c0_i32_1 = arith.constant 0 : i32
    return %c0_i32, %c0_i32_0 : i32, i32
  }
  func.func @transform_8(%arg0: i32) -> (i32, i32, i32) {
    %c0_i32 = arith.constant 0 : i32
    %c0_i32_0 = arith.constant 0 : i32
    %c0_i32_1 = arith.constant 0 : i32
    return %arg0, %c0_i32, %c0_i32_0 : i32, i32, i32
  }
}

</mosaic_0001>

<llo_original>
// kernel: tpu_custom_call.1
$region0: #{tpu_custom_call.1}
  #allocation0 [shape = 'u32[]', space=smem, size = 0x4, offset = 0x4, fixed_abs, tag = 'smem constant byte address 0x4 - core index']
  #allocation1 [shape = 'u32[144,128]{1,0:T(1,128)}', space=vmem, size = 0x12000, scoped, tag = 'internal scratch']
  %s0 = inlined_call_operand.vmem [shape: bf16[2,8,256], index: 0, kind: input, shape index: {}]
  %s1 = inlined_call_operand.hbm [shape: bf16[2,8,64], index: 1, kind: input, shape index: {}]
  %s2 = inlined_call_operand.hbm [shape: bf16[64,256], index: 2, kind: input, shape index: {}]
  %s3 = inlined_call_operand.hbm [shape: f32[9,256], index: 3, kind: input, shape index: {}]
  %s4 = inlined_call_operand.vmem [shape: bf16[8,144], index: 4, kind: input, shape index: {}]
  %s5 = inlined_call_operand.vmem [shape: f32[8,1], index: 5, kind: input, shape index: {}]
  %s6 = inlined_call_operand.vmem [shape: bf16[8,72], index: 6, kind: input, shape index: {}]
  %s7 = inlined_call_operand.vmem [shape: f32[8,1], index: 7, kind: input, shape index: {}]
  %s8 = inlined_call_operand.hbm [shape: bf16[2,8,256], index: 8, kind: output, shape index: {}]
  %s9 = sld [smem:[#allocation0]]
  $region77: #{tpu_custom_call.1} parent=0
    _
  %s11 = ssub.s32 1, %s9
  %s12 = scalar_select 0, %s11, %s9
  $region1: #{tpu_custom_call.1} parent=0
    #allocation2 [shape = 'u8[4096]{0}', space=vmem, size = 0x1000, scoped, tag = 'input window, operand 1']
    #allocation3 [shape = 's32[2]{0}', space=sflag, size = 0x8, scoped, tag = 'scoped memory for tpu_custom_call.1']
    #allocation4 [shape = 's32[2]{0}', space=sflag, size = 0x8, scoped, tag = 'scoped memory for tpu_custom_call.1']
    #allocation5 [shape = 'u8[32768]{0}', space=vmem, size = 0x8000, scoped, tag = 'input window, operand 2, single buffered']
    #allocation6 [shape = 's32[1]{0}', space=sflag, size = 0x4, scoped, tag = 'scoped memory for tpu_custom_call.1']
    #allocation7 [shape = 'u8[16384]{0}', space=vmem, size = 0x4000, scoped, tag = 'input window, operand 3, single buffered']
    #allocation8 [shape = 'u8[8192]{0}', space=vmem, size = 0x2000, scoped, tag = 'output window, operand 0']
    %13 = vsyncpa [#allocation3], 0
    %s14 = scalar_lea.sflag [#allocation3], 1
    %15 = vsyncpa %s14, 0
    %16 = vsyncpa [#allocation6], 0
    %17 = vsyncpa [#allocation4], 0
    %s18 = scalar_lea.sflag [#allocation4], 1
    %19 = vsyncpa %s18, 0
    loop: start=0, step=1, limit=4
    $region2: #{tpu_custom_call.1} parent=1 // loop_pre_header
      _
    $region3: #{tpu_custom_call.1} parent=1 // loop_header
      %s21 = sphi 0, %s25
      %p22 = scmp.ge.s32.totalorder %s21, 4
      %s31 = sphi 0, %s33
      %s34 = sphi 0, %s31
      %s35 = sphi 0, %s34
      %s51 = sphi 0, %s35
      %s57 = sphi 0, %s59
      %s60 = sphi 0, %s57
      %s61 = sphi 0, %s60
      %s77 = sphi 0, %s61
      %s81 = sphi 0, %s81
      %s83 = sphi 0, %s81
      %s84 = sphi 0, %s83
      %s98 = sphi 0, %s84
      %s102 = sphi 0, %s102
      %s104 = sphi 0, %s102
      %s105 = sphi 0, %s104
      %s119 = sphi 0, %s105
      %s123 = sphi 0, %s123
      %s125 = sphi 0, %s123
      %s126 = sphi 0, %s125
      %s140 = sphi 0, %s126
      %s144 = sphi 0, %s144
      %s146 = sphi 0, %s144
      %s147 = sphi 0, %s146
      %s161 = sphi 0, %s147
      %s165 = sphi 0, %s165
      %s167 = sphi 0, %s165
      %s168 = sphi 0, %s167
      %s182 = sphi 0, %s168
      %s186 = sphi 0, %s186
      %s188 = sphi 0, %s186
      %s189 = sphi 0, %s188
      %s203 = sphi 0, %s189
      %s209 = sphi 0, %s211
      %s212 = sphi 0, %s209
      %s213 = sphi 0, %s212
      %s229 = sphi 0, %s213
    $region4: #{tpu_custom_call.1} parent=1 // loop_header_branch
      %24 = sbr.rel (%p22) target = $region8
    $region5: #{tpu_custom_call.1} parent=1 // loop_body
      %s26 = ssub.s32 %s21, 1
      %s27 = ssub.s32 %s21, 2
      %s28 = sadd.s32 %s21, 1
      %s29 = ssub.s32 %s21, %s28
      %p30 = scmp.eq.s32.totalorder %s29, 0
      %s32 = sadd.s32 %s31, 1
      %s33 = scalar_select %p30, %s31, %s32
      %p36 = pneg %p30
      %p37 = scmp.eq.s32.totalorder %s21, 1
      %p38 = por %p36, %p37
      %p39 = scmp.ne.s32.totalorder %s31, %s34
      %p40 = scmp.eq.s32.totalorder %s21, 0
      %p41 = por %p39, %p40
      %p42 = scmp.ne.s32.totalorder %s31, %s34
      %p43 = scmp.eq.s32.totalorder %s26, 1
      %p44 = por %p42, %p43
      %p45 = scmp.ne.s32.totalorder %s34, %s35
      %p46 = scmp.eq.s32.totalorder %s26, 0
      %p47 = por %p45, %p46
      %p48 = scmp.ne.s32.totalorder %s34, %s35
      %p49 = scmp.eq.s32.totalorder %s27, 1
      %p50 = por %p48, %p49
      %p52 = scmp.ne.s32.totalorder %s35, %s51
      %p53 = scmp.eq.s32.totalorder %s27, 0
      %p54 = por %p52, %p53
      %s55 = ssub.s32 %s21, %s28
      %p56 = scmp.eq.s32.totalorder %s55, 0
      %s58 = sadd.s32 %s57, 1
      %s59 = scalar_select %p56, %s57, %s58
      %p62 = pneg %p56
      %p63 = scmp.eq.s32.totalorder %s21, 1
      %p64 = por %p62, %p63
      %p65 = scmp.ne.s32.totalorder %s57, %s60
      %p66 = scmp.eq.s32.totalorder %s21, 0
      %p67 = por %p65, %p66
      %p68 = scmp.ne.s32.totalorder %s57, %s60
      %p69 = scmp.eq.s32.totalorder %s26, 1
      %p70 = por %p68, %p69
      %p71 = scmp.ne.s32.totalorder %s60, %s61
      %p72 = scmp.eq.s32.totalorder %s26, 0
      %p73 = por %p71, %p72
      %p74 = scmp.ne.s32.totalorder %s60, %s61
      %p75 = scmp.eq.s32.totalorder %s27, 1
      %p76 = por %p74, %p75
      %p78 = scmp.ne.s32.totalorder %s61, %s77
      %p79 = scmp.eq.s32.totalorder %s27, 0
      %p80 = por %p78, %p79
      %s82 = sadd.s32 %s81, 1
      %p85 = scmp.eq.s32.totalorder %s21, 1
      %p86 = scmp.ne.s32.totalorder %s81, %s83
      %p87 = scmp.eq.s32.totalorder %s21, 0
      %p88 = por %p86, %p87
      %p89 = scmp.ne.s32.totalorder %s81, %s83
      %p90 = scmp.eq.s32.totalorder %s26, 1
      %p91 = por %p89, %p90
      %p92 = scmp.ne.s32.totalorder %s83, %s84
      %p93 = scmp.eq.s32.totalorder %s26, 0
      %p94 = por %p92, %p93
      %p95 = scmp.ne.s32.totalorder %s83, %s84
      %p96 = scmp.eq.s32.totalorder %s27, 1
      %p97 = por %p95, %p96
      %p99 = scmp.ne.s32.totalorder %s84, %s98
      %p100 = scmp.eq.s32.totalorder %s27, 0
      %p101 = por %p99, %p100
      %s103 = sadd.s32 %s102, 1
      %p106 = scmp.eq.s32.totalorder %s21, 1
      %p107 = scmp.ne.s32.totalorder %s102, %s104
      %p108 = scmp.eq.s32.totalorder %s21, 0
      %p109 = por %p107, %p108
      %p110 = scmp.ne.s32.totalorder %s102, %s104
      %p111 = scmp.eq.s32.totalorder %s26, 1
      %p112 = por %p110, %p111
      %p113 = scmp.ne.s32.totalorder %s104, %s105
      %p114 = scmp.eq.s32.totalorder %s26, 0
      %p115 = por %p113, %p114
      %p116 = scmp.ne.s32.totalorder %s104, %s105
      %p117 = scmp.eq.s32.totalorder %s27, 1
      %p118 = por %p116, %p117
      %p120 = scmp.ne.s32.totalorder %s105, %s119
      %p121 = scmp.eq.s32.totalorder %s27, 0
      %p122 = por %p120, %p121
      %s124 = sadd.s32 %s123, 1
      %p127 = scmp.eq.s32.totalorder %s21, 1
      %p128 = scmp.ne.s32.totalorder %s123, %s125
      %p129 = scmp.eq.s32.totalorder %s21, 0
      %p130 = por %p128, %p129
      %p131 = scmp.ne.s32.totalorder %s123, %s125
      %p132 = scmp.eq.s32.totalorder %s26, 1
      %p133 = por %p131, %p132
      %p134 = scmp.ne.s32.totalorder %s125, %s126
      %p135 = scmp.eq.s32.totalorder %s26, 0
      %p136 = por %p134, %p135
      %p137 = scmp.ne.s32.totalorder %s125, %s126
      %p138 = scmp.eq.s32.totalorder %s27, 1
      %p139 = por %p137, %p138
      %p141 = scmp.ne.s32.totalorder %s126, %s140
      %p142 = scmp.eq.s32.totalorder %s27, 0
      %p143 = por %p141, %p142
      %s145 = sadd.s32 %s144, 1
      %p148 = scmp.eq.s32.totalorder %s21, 1
      %p149 = scmp.ne.s32.totalorder %s144, %s146
      %p150 = scmp.eq.s32.totalorder %s21, 0
      %p151 = por %p149, %p150
      %p152 = scmp.ne.s32.totalorder %s144, %s146
      %p153 = scmp.eq.s32.totalorder %s26, 1
      %p154 = por %p152, %p153
      %p155 = scmp.ne.s32.totalorder %s146, %s147
      %p156 = scmp.eq.s32.totalorder %s26, 0
      %p157 = por %p155, %p156
      %p158 = scmp.ne.s32.totalorder %s146, %s147
      %p159 = scmp.eq.s32.totalorder %s27, 1
      %p160 = por %p158, %p159
      %p162 = scmp.ne.s32.totalorder %s147, %s161
      %p163 = scmp.eq.s32.totalorder %s27, 0
      %p164 = por %p162, %p163
      %s166 = sadd.s32 %s165, 1
      %p169 = scmp.eq.s32.totalorder %s21, 1
      %p170 = scmp.ne.s32.totalorder %s165, %s167
      %p171 = scmp.eq.s32.totalorder %s21, 0
      %p172 = por %p170, %p171
      %p173 = scmp.ne.s32.totalorder %s165, %s167
      %p174 = scmp.eq.s32.totalorder %s26, 1
      %p175 = por %p173, %p174
      %p176 = scmp.ne.s32.totalorder %s167, %s168
      %p177 = scmp.eq.s32.totalorder %s26, 0
      %p178 = por %p176, %p177
      %p179 = scmp.ne.s32.totalorder %s167, %s168
      %p180 = scmp.eq.s32.totalorder %s27, 1
      %p181 = por %p179, %p180
      %p183 = scmp.ne.s32.totalorder %s168, %s182
      %p184 = scmp.eq.s32.totalorder %s27, 0
      %p185 = por %p183, %p184
      %s187 = sadd.s32 %s186, 1
      %p190 = scmp.eq.s32.totalorder %s21, 1
      %p191 = scmp.ne.s32.totalorder %s186, %s188
      %p192 = scmp.eq.s32.totalorder %s21, 0
      %p193 = por %p191, %p192
      %p194 = scmp.ne.s32.totalorder %s186, %s188
      %p195 = scmp.eq.s32.totalorder %s26, 1
      %p196 = por %p194, %p195
      %p197 = scmp.ne.s32.totalorder %s188, %s189
      %p198 = scmp.eq.s32.totalorder %s26, 0
      %p199 = por %p197, %p198
      %p200 = scmp.ne.s32.totalorder %s188, %s189
      %p201 = scmp.eq.s32.totalorder %s27, 1
      %p202 = por %p200, %p201
      %p204 = scmp.ne.s32.totalorder %s189, %s203
      %p205 = scmp.eq.s32.totalorder %s27, 0
      %p206 = por %p204, %p205
      %s207 = ssub.s32 %s21, %s28
      %p208 = scmp.eq.s32.totalorder %s207, 0
      %s210 = sadd.s32 %s209, 1
      %s211 = scalar_select %p208, %s209, %s210
      %p214 = pneg %p208
      %p215 = scmp.eq.s32.totalorder %s21, 1
      %p216 = por %p214, %p215
      %p217 = scmp.ne.s32.totalorder %s209, %s212
      %p218 = scmp.eq.s32.totalorder %s21, 0
      %p219 = por %p217, %p218
      %p220 = scmp.ne.s32.totalorder %s209, %s212
      %p221 = scmp.eq.s32.totalorder %s26, 1
      %p222 = por %p220, %p221
      %p223 = scmp.ne.s32.totalorder %s212, %s213
      %p224 = scmp.eq.s32.totalorder %s26, 0
      %p225 = por %p223, %p224
      %p226 = scmp.ne.s32.totalorder %s212, %s213
      %p227 = scmp.eq.s32.totalorder %s27, 1
      %p228 = por %p226, %p227
      %p230 = scmp.ne.s32.totalorder %s213, %s229
      %p231 = scmp.eq.s32.totalorder %s27, 0
      %p232 = por %p230, %p231
      %p233 = scmp.le.s32.totalorder 1, %s21
      %p234 = scmp.lt.s32.totalorder %s21, 3
      %p235 = pnand %p233, %p234
      %p236 = pneg %p235
      // Predicated region
      $region9: #{tpu_custom_call.1} parent=5 // pred_check
        _
      $region10: #{tpu_custom_call.1} parent=5 // pred_check_branch
        %238 = sbr.rel (%p235) target = $region12
      $region11: #{tpu_custom_call.1} parent=5 // pred_region
        %s239 = ssub.s32 %s21, 1
        // Predicated region
        $region13: #{tpu_custom_call.1} parent=11 // pred_check
          %p240 = pneg %p94
        $region14: #{tpu_custom_call.1} parent=11 // pred_check_branch
          %242 = sbr.rel (%p240) target = $region16
        $region15: #{tpu_custom_call.1} parent=11 // pred_region
          %s244 = ssub.s32 1024, 1024
          %245 = vsyncadd [#allocation6], %s244
          %s246 = sshll.u32 [#allocation5], 4
          %s247 = int_to_ptr.vmem [resolvable:$true] %s246
          %252 = dma.hbm_to_vmem [thread:$0]  %s2, 1024, %s247, [#allocation6], 128, 128, 8
        $region16: #{tpu_custom_call.1} parent=11 // pred_fallthru
          _
        // Predicated region
        $region17: #{tpu_custom_call.1} parent=11 // pred_check
          %p253 = pneg %p115
        $region18: #{tpu_custom_call.1} parent=11 // pred_check_branch
          %255 = sbr.rel (%p253) target = $region20
        $region19: #{tpu_custom_call.1} parent=11 // pred_region
          %s257 = ssub.s32 512, 512
          %258 = vsyncadd [#allocation6], %s257
          %s259 = sshll.u32 [#allocation7], 4
          %s260 = int_to_ptr.vmem [resolvable:$true] %s259
          %265 = dma.hbm_to_vmem [thread:$0]  %s3, 512, %s260, [#allocation6], 256, 256, 16
        $region20: #{tpu_custom_call.1} parent=11 // pred_fallthru
          _
        // Predicated region
        $region21: #{tpu_custom_call.1} parent=11 // pred_check
          %p266 = pneg %p136
        $region22: #{tpu_custom_call.1} parent=11 // pred_check_branch
          %268 = sbr.rel (%p266) target = $region24
        $region23: #{tpu_custom_call.1} parent=11 // pred_region
          _
        $region24: #{tpu_custom_call.1} parent=11 // pred_fallthru
          _
        // Predicated region
        $region25: #{tpu_custom_call.1} parent=11 // pred_check
          %p269 = pneg %p157
        $region26: #{tpu_custom_call.1} parent=11 // pred_check_branch
          %271 = sbr.rel (%p269) target = $region28
        $region27: #{tpu_custom_call.1} parent=11 // pred_region
          _
        $region28: #{tpu_custom_call.1} parent=11 // pred_fallthru
          _
        // Predicated region
        $region29: #{tpu_custom_call.1} parent=11 // pred_check
          %p272 = pneg %p178
        $region30: #{tpu_custom_call.1} parent=11 // pred_check_branch
          %274 = sbr.rel (%p272) target = $region32
        $region31: #{tpu_custom_call.1} parent=11 // pred_region
          _
        $region32: #{tpu_custom_call.1} parent=11 // pred_fallthru
          _
        // Predicated region
        $region33: #{tpu_custom_call.1} parent=11 // pred_check
          %p275 = pneg %p199
        $region34: #{tpu_custom_call.1} parent=11 // pred_check_branch
          %277 = sbr.rel (%p275) target = $region36
        $region35: #{tpu_custom_call.1} parent=11 // pred_region
          _
        $region36: #{tpu_custom_call.1} parent=11 // pred_fallthru
          _
      $region12: #{tpu_custom_call.1} parent=5 // pred_fallthru
        _
      %p278 = scmp.lt.s32.totalorder %s21, 2
      // Predicated region
      $region37: #{tpu_custom_call.1} parent=5 // pred_check
        %p279 = pneg %p278
      $region38: #{tpu_custom_call.1} parent=5 // pred_check_branch
        %281 = sbr.rel (%p279) target = $region40
      $region39: #{tpu_custom_call.1} parent=5 // pred_region
        // Predicated region
        $region41: #{tpu_custom_call.1} parent=39 // pred_check
          %p282 = pneg %p41
        $region42: #{tpu_custom_call.1} parent=39 // pred_check_branch
          %284 = sbr.rel (%p282) target = $region44
        $region43: #{tpu_custom_call.1} parent=39 // pred_region
          %p285 = scmp.lt.s32.totalorder %s21, 1
          %s286 = scalar_select %p285, %s21, 1
          %s287 = smul.addr %s286, 2
          %s288 = smul.addr %s287, 4
          %s289 = scalar_lea.vmem %s0, %s288
        $region44: #{tpu_custom_call.1} parent=39 // pred_fallthru
          _
        // Predicated region
        $region45: #{tpu_custom_call.1} parent=39 // pred_check
          %p290 = pneg %p67
        $region46: #{tpu_custom_call.1} parent=39 // pred_check_branch
          %292 = sbr.rel (%p290) target = $region48
        $region47: #{tpu_custom_call.1} parent=39 // pred_region
          %s293 = sand.u32 %s57, 1
          %s294 = scalar_lea.sflag [#allocation3], %s293
          %s295 = sand.u32 %s57, 1
          %s296 = smul.addr %s295, 4
          %s297 = scalar_lea.vmem [#allocation2], %s296
          %s299 = ssub.s32 64, 64
          %300 = vsyncadd %s294, %s299
          %s301 = smul.addr %s21, 64
          %s302 = scalar_lea.hbm %s1, %s301
          %s304 = sshll.u32 %s297, 4
          %s305 = int_to_ptr.vmem [resolvable:$true] %s304
          %307 = dma.hbm_to_vmem [thread:$0]  %s302, 64, %s305, %s294
        $region48: #{tpu_custom_call.1} parent=39 // pred_fallthru
          _
      $region40: #{tpu_custom_call.1} parent=5 // pred_fallthru
        _
      %p308 = scmp.le.s32.totalorder 1, %s21
      %p309 = scmp.lt.s32.totalorder %s21, 3
      %p310 = pnand %p308, %p309
      %p311 = pneg %p310
      // Predicated region
      $region49: #{tpu_custom_call.1} parent=5 // pred_check
        _
      $region50: #{tpu_custom_call.1} parent=5 // pred_check_branch
        %313 = sbr.rel (%p310) target = $region52
      $region51: #{tpu_custom_call.1} parent=5 // pred_region
        %s314 = ssub.s32 %s21, 1
        %s315 = sand.u32 %s60, 1
        %s316 = scalar_lea.sflag [#allocation3], %s315
        %s317 = sand.u32 %s60, 1
        %s318 = smul.addr %s317, 4
        %s319 = scalar_lea.vmem [#allocation2], %s318
        // Predicated region
        $region53: #{tpu_custom_call.1} parent=51 // pred_check
          %p320 = pneg %p73
        $region54: #{tpu_custom_call.1} parent=51 // pred_check_branch
          %322 = sbr.rel (%p320) target = $region56
        $region55: #{tpu_custom_call.1} parent=51 // pred_region
          %323 = dma.done %s316, 64
        $region56: #{tpu_custom_call.1} parent=51 // pred_fallthru
          _
        // Predicated region
        $region57: #{tpu_custom_call.1} parent=51 // pred_check
          %p324 = pneg %p94
        $region58: #{tpu_custom_call.1} parent=51 // pred_check_branch
          %326 = sbr.rel (%p324) target = $region60
        $region59: #{tpu_custom_call.1} parent=51 // pred_region
          %327 = dma.done [#allocation6], 1024
        $region60: #{tpu_custom_call.1} parent=51 // pred_fallthru
          _
        // Predicated region
        $region61: #{tpu_custom_call.1} parent=51 // pred_check
          %p328 = pneg %p115
        $region62: #{tpu_custom_call.1} parent=51 // pred_check_branch
          %330 = sbr.rel (%p328) target = $region64
        $region63: #{tpu_custom_call.1} parent=51 // pred_region
          %331 = dma.done [#allocation6], 512
        $region64: #{tpu_custom_call.1} parent=51 // pred_fallthru
          _
        %p332 = scmp.lt.s32.totalorder %s26, 1
        %s333 = scalar_select %p332, %s26, 1
        %s334 = smul.addr %s333, 2
        %s335 = smul.addr %s334, 4
        %s336 = scalar_lea.vmem %s0, %s335
        %p337 = pneg %p47
        %p338 = pneg %p44
        %s339 = sand.u32 %s60, 1
        %s340 = scalar_lea.sflag [#allocation3], %s339
        %s341 = sand.u32 %s60, 1
        %s342 = smul.addr %s341, 4
        %s343 = scalar_lea.vmem [#allocation2], %s342
        %p344 = pneg %p73
        %p345 = pneg %p70
        %p346 = pneg %p94
        %p347 = pneg %p91
        %p348 = pneg %p115
        %p349 = pneg %p112
        %p350 = pneg %p136
        %p351 = pneg %p133
        %p352 = pneg %p157
        %p353 = pneg %p154
        %p354 = pneg %p178
        %p355 = pneg %p175
        %p356 = pneg %p199
        %p357 = pneg %p196
        %p358 = pneg %p225
        %p359 = pneg %p222
        %s360 = sand.u32 %s212, 1
        %s361 = scalar_lea.sflag [#allocation4], %s360
        %s362 = sand.u32 %s212, 1
        %s363 = smul.addr %s362, 8
        %s364 = scalar_lea.vmem [#allocation8], %s363
        %p365 = scmp.lt.s32.totalorder %s26, 1
        %s366 = scalar_select %p365, %s26, 1
        %s367 = smul.addr %s366, 2
        %s368 = smul.addr %s367, 4
        %s369 = scalar_lea.vmem %s0, %s368
        %v371 = vld [vmem:[#allocation5] sm:$0xff]
        %v372 = vld [vmem:[#allocation5 + $0x8] sm:$0xff]
        %v373 = vld [vmem:[#allocation5 + $0x10] sm:$0xff]
        %v374 = vld [vmem:[#allocation5 + $0x18] sm:$0xff]
        %v375 = vld [vmem:[#allocation5 + $0x20] sm:$0xff]
        %v376 = vld [vmem:[#allocation5 + $0x28] sm:$0xff]
        %v377 = vld [vmem:[#allocation5 + $0x30] sm:$0xff]
        %v378 = vld [vmem:[#allocation5 + $0x38] sm:$0xff]
        %v379 = vld [vmem:[%s319] sm:$0xf]
        %v388 = vunpack.c.l.b16 %v371
        %v389 = vunpack.c.h.b16 %v371
        %v390 = vunpack.c.l.b16 %v372
        %v391 = vunpack.c.h.b16 %v372
        %v392 = vunpack.c.l.b16 %v373
        %v393 = vunpack.c.h.b16 %v373
        %v394 = vunpack.c.l.b16 %v374
        %v395 = vunpack.c.h.b16 %v374
        %v396 = vunpack.c.l.b16 %v375
        %v397 = vunpack.c.h.b16 %v375
        %v398 = vunpack.c.l.b16 %v376
        %v399 = vunpack.c.h.b16 %v376
        %v400 = vunpack.c.l.b16 %v377
        %v401 = vunpack.c.h.b16 %v377
        %v402 = vunpack.c.l.b16 %v378
        %v403 = vunpack.c.h.b16 %v378
        %v404 = vpack.c.b16 %v390, %v388
        %v405 = vpack.c.b16 %v391, %v389
        %v406 = vpack.c.b16 %v394, %v392
        %v407 = vpack.c.b16 %v395, %v393
        %v408 = vpack.c.b16 %v398, %v396
        %v409 = vpack.c.b16 %v399, %v397
        %v410 = vpack.c.b16 %v402, %v400
        %v411 = vpack.c.b16 %v403, %v401
        %vm420 = vcmask 523264
        %v422 = vsel %vm420, %v379, 0
        %424 = vmatprep.subr.bf16.mxu0 %v405
        %425 = vmatpush1.bf16.msra.mxu0 %v404
        %426 = vmatprep.subr.bf16.mxu0 %v407
        %427 = vmatpush1.bf16.msra.mxu0 %v406
        %428 = vmatprep.subr.bf16.mxu0 %v409
        %429 = vmatpush1.bf16.msra.mxu0 %v408
        %430 = vmatprep.subr.bf16.mxu0 %v411
        %431 = vmatpush1.bf16.msra.mxu0 %v410
        %432 = vmatprep.subr.bf16.mxu0 0
        %433 = vmatpush1.bf16.msra.mxu0 0
        %434 = vmatprep.subr.bf16.mxu0 0
        %435 = vmatpush1.bf16.msra.mxu0 0
        %436 = vmatprep.subr.bf16.mxu0 0
        %437 = vmatpush1.bf16.msra.mxu0 0
        %438 = vmatprep.subr.bf16.mxu0 0
        %439 = vmatpush1.bf16.msra.mxu0 0
        %440 = vmatprep.subr.bf16.mxu0 0
        %441 = vmatpush1.bf16.msra.mxu0 0
        %442 = vmatprep.subr.bf16.mxu0 0
        %443 = vmatpush1.bf16.msra.mxu0 0
        %444 = vmatprep.subr.bf16.mxu0 0
        %445 = vmatpush1.bf16.msra.mxu0 0
        %446 = vmatprep.subr.bf16.mxu0 0
        %447 = vmatpush1.bf16.msra.mxu0 0
        %448 = vmatprep.subr.bf16.mxu0 0
        %449 = vmatpush1.bf16.msra.mxu0 0
        %450 = vmatprep.subr.bf16.mxu0 0
        %451 = vmatpush1.bf16.msra.mxu0 0
        %452 = vmatprep.subr.bf16.mxu0 0
        %453 = vmatpush1.bf16.msra.mxu0 0
        %454 = vmatprep.subr.bf16.mxu0 0
        %455 = vmatpush1.bf16.msra.mxu0 0
        %456 = vmatprep.mubr.bf16.mxu0 0
        %457 = vmatmul.mubr.bf16.gmra.mrb[0].mxu0 %v422
        %v458 = vpop.f32.mrb[0].mxu0
        %v459 = vadd.f32 0.0, %v458
        %v460 = vpop.f32.mrb[0].mxu0
        %v461 = vadd.f32 0.0, %v460
        %v462 = vpop.f32.mrb[0].mxu0
        %v463 = vpop.f32.mrb[0].mxu0
        %464 = vdwg.mxu0
        %v465 = vld [vmem:[%s369] sm:$0xff]
        %v466 = vunpack.c.l.bf16 %v465
        %v467 = vunpack.c.h.bf16 %v465
        %v468 = vld [vmem:[%s4] sm:$0xff]
        %469 = vrot.lane.b32.xlu0 %v466, 17
        %v470 = vpop.permute.xlu0 %469
        %471 = vrot.lane.b32.xlu0 %v459, 17
        %v472 = vpop.permute.xlu0 %471
        %473 = vrot.lane.b32.xlu0 %v467, 17
        %v474 = vpop.permute.xlu0 %473
        %475 = vrot.lane.b32.xlu0 %v461, 17
        %v476 = vpop.permute.xlu0 %475
        %v477 = vlaneseq
        %v478 = vand.u32 %v477, 127
        %vm479 = vcmp.lt.s32.totalorder %v478, 17
        %v480 = vsel %vm479, %v470, %v474
        %v481 = vsel %vm479, %v472, %v476
        %v482 = vsel %vm479, %v474, %v470
        %v483 = vsel %vm479, %v476, %v472
        %v484 = vld [vmem:[#allocation7] ss:$8 sm:$0x3]
        %v486 = vlaneseq
        %v487 = vshrl.u32 %v486, 7
        %v488 = vsub.s32 0, %v487
        %v489 = vrot.slane %v484, %v488
        %v490 = vlaneseq
        %v491 = vshrl.u32 %v490, 7
        %v492 = vsub.s32 1, %v491
        %v493 = vrot.slane %v484, %v492
        %v496 = vmul.f32 %v482, %v489
        %v497 = vmul.f32 %v480, %v493
        %v498 = vmul.f32 %v483, %v489
        %v499 = vmul.f32 %v481, %v493
        %500 = vrot.lane.b32.xlu0 %v466, 16
        %v501 = vpop.permute.xlu0 %500
        %502 = vrot.lane.b32.xlu0 %v459, 16
        %v503 = vpop.permute.xlu0 %502
        %504 = vrot.lane.b32.xlu0 %v467, 16
        %v505 = vpop.permute.xlu0 %504
        %506 = vrot.lane.b32.xlu0 %v461, 16
        %v507 = vpop.permute.xlu0 %506
        %vm508 = vcmp.lt.s32.totalorder %v478, 16
        %v509 = vsel %vm508, %v501, %v505
        %v510 = vsel %vm508, %v503, %v507
        %v511 = vsel %vm508, %v505, %v501
        %v512 = vsel %vm508, %v507, %v503
        %s513 = scalar_lea.vmem [#allocation7], 1
        %v514 = vld [vmem:[%s513] ss:$8 sm:$0x3]
        %v516 = vlaneseq
        %v517 = vshrl.u32 %v516, 7
        %v518 = vsub.s32 0, %v517
        %v519 = vrot.slane %v514, %v518
        %v520 = vlaneseq
        %v521 = vshrl.u32 %v520, 7
        %v522 = vsub.s32 1, %v521
        %v523 = vrot.slane %v514, %v522
        %v526 = vmul.f32 %v511, %v519
        %v527 = vmul.f32 %v509, %v523
        %v528 = vmul.f32 %v512, %v519
        %v529 = vmul.f32 %v510, %v523
        %530 = vrot.lane.b32.xlu0 %v466, 15
        %v531 = vpop.permute.xlu0 %530
        %532 = vrot.lane.b32.xlu0 %v459, 15
        %v533 = vpop.permute.xlu0 %532
        %534 = vrot.lane.b32.xlu0 %v467, 15
        %v535 = vpop.permute.xlu0 %534
        %536 = vrot.lane.b32.xlu0 %v461, 15
        %v537 = vpop.permute.xlu0 %536
        %vm538 = vcmp.lt.s32.totalorder %v478, 15
        %v539 = vsel %vm538, %v531, %v535
        %v540 = vsel %vm538, %v533, %v537
        %v541 = vsel %vm538, %v535, %v531
        %v542 = vsel %vm538, %v537, %v533
        %s543 = scalar_lea.vmem [#allocation7], 2
        %v544 = vld [vmem:[%s543] ss:$8 sm:$0x3]
        %v546 = vlaneseq
        %v547 = vshrl.u32 %v546, 7
        %v548 = vsub.s32 0, %v547
        %v549 = vrot.slane %v544, %v548
        %v550 = vlaneseq
        %v551 = vshrl.u32 %v550, 7
        %v552 = vsub.s32 1, %v551
        %v553 = vrot.slane %v544, %v552
        %v556 = vmul.f32 %v541, %v549
        %v557 = vmul.f32 %v539, %v553
        %v558 = vmul.f32 %v542, %v549
        %v559 = vmul.f32 %v540, %v553
        %560 = vrot.lane.b32.xlu0 %v466, 1
        %v561 = vpop.permute.xlu0 %560
        %562 = vrot.lane.b32.xlu0 %v459, 1
        %v563 = vpop.permute.xlu0 %562
        %564 = vrot.lane.b32.xlu0 %v467, 1
        %v565 = vpop.permute.xlu0 %564
        %566 = vrot.lane.b32.xlu0 %v461, 1
        %v567 = vpop.permute.xlu0 %566
        %vm568 = vcmp.lt.s32.totalorder %v478, 1
        %v569 = vsel %vm568, %v561, %v565
        %v570 = vsel %vm568, %v563, %v567
        %v571 = vsel %vm568, %v565, %v561
        %v572 = vsel %vm568, %v567, %v563
        %s573 = scalar_lea.vmem [#allocation7], 3
        %v574 = vld [vmem:[%s573] ss:$8 sm:$0x3]
        %v576 = vlaneseq
        %v577 = vshrl.u32 %v576, 7
        %v578 = vsub.s32 0, %v577
        %v579 = vrot.slane %v574, %v578
        %v580 = vlaneseq
        %v581 = vshrl.u32 %v580, 7
        %v582 = vsub.s32 1, %v581
        %v583 = vrot.slane %v574, %v582
        %v586 = vmul.f32 %v571, %v579
        %v587 = vmul.f32 %v569, %v583
        %v588 = vmul.f32 %v572, %v579
        %v589 = vmul.f32 %v570, %v583
        %590 = vrot.lane.b32.xlu0 %v466, 127
        %v591 = vpop.permute.xlu0 %590
        %592 = vrot.lane.b32.xlu0 %v459, 127
        %v593 = vpop.permute.xlu0 %592
        %594 = vrot.lane.b32.xlu0 %v467, 127
        %v595 = vpop.permute.xlu0 %594
        %596 = vrot.lane.b32.xlu0 %v461, 127
        %v597 = vpop.permute.xlu0 %596
        %vm598 = vcmp.lt.s32.totalorder %v478, 127
        %v599 = vsel %vm598, %v591, %v595
        %v600 = vsel %vm598, %v593, %v597
        %v601 = vsel %vm598, %v595, %v591
        %v602 = vsel %vm598, %v597, %v593
        %s603 = scalar_lea.vmem [#allocation7], 5
        %v604 = vld [vmem:[%s603] ss:$8 sm:$0x3]
        %v606 = vlaneseq
        %v607 = vshrl.u32 %v606, 7
        %v608 = vsub.s32 0, %v607
        %v609 = vrot.slane %v604, %v608
        %v610 = vlaneseq
        %v611 = vshrl.u32 %v610, 7
        %v612 = vsub.s32 1, %v611
        %v613 = vrot.slane %v604, %v612
        %v616 = vmul.f32 %v599, %v609
        %v617 = vmul.f32 %v601, %v613
        %v618 = vmul.f32 %v600, %v609
        %v619 = vmul.f32 %v602, %v613
        %620 = vrot.lane.b32.xlu0 %v466, 113
        %v621 = vpop.permute.xlu0 %620
        %622 = vrot.lane.b32.xlu0 %v459, 113
        %v623 = vpop.permute.xlu0 %622
        %624 = vrot.lane.b32.xlu0 %v467, 113
        %v625 = vpop.permute.xlu0 %624
        %626 = vrot.lane.b32.xlu0 %v461, 113
        %v627 = vpop.permute.xlu0 %626
        %vm628 = vcmp.lt.s32.totalorder %v478, 113
        %v629 = vsel %vm628, %v621, %v625
        %v630 = vsel %vm628, %v623, %v627
        %v631 = vsel %vm628, %v625, %v621
        %v632 = vsel %vm628, %v627, %v623
        %s633 = scalar_lea.vmem [#allocation7], 6
        %v634 = vld [vmem:[%s633] ss:$8 sm:$0x3]
        %v636 = vlaneseq
        %v637 = vshrl.u32 %v636, 7
        %v638 = vsub.s32 0, %v637
        %v639 = vrot.slane %v634, %v638
        %v640 = vlaneseq
        %v641 = vshrl.u32 %v640, 7
        %v642 = vsub.s32 1, %v641
        %v643 = vrot.slane %v634, %v642
        %v646 = vmul.f32 %v629, %v639
        %v647 = vmul.f32 %v631, %v643
        %v648 = vmul.f32 %v630, %v639
        %v649 = vmul.f32 %v632, %v643
        %650 = vrot.lane.b32.xlu0 %v466, 112
        %v651 = vpop.permute.xlu0 %650
        %652 = vrot.lane.b32.xlu0 %v459, 112
        %v653 = vpop.permute.xlu0 %652
        %654 = vrot.lane.b32.xlu0 %v467, 112
        %v655 = vpop.permute.xlu0 %654
        %656 = vrot.lane.b32.xlu0 %v461, 112
        %v657 = vpop.permute.xlu0 %656
        %vm658 = vcmp.lt.s32.totalorder %v478, 112
        %v659 = vsel %vm658, %v651, %v655
        %v660 = vsel %vm658, %v653, %v657
        %v661 = vsel %vm658, %v655, %v651
        %v662 = vsel %vm658, %v657, %v653
        %s663 = scalar_lea.vmem [#allocation7], 7
        %v664 = vld [vmem:[%s663] ss:$8 sm:$0x3]
        %v666 = vlaneseq
        %v667 = vshrl.u32 %v666, 7
        %v668 = vsub.s32 0, %v667
        %v669 = vrot.slane %v664, %v668
        %v670 = vlaneseq
        %v671 = vshrl.u32 %v670, 7
        %v672 = vsub.s32 1, %v671
        %v673 = vrot.slane %v664, %v672
        %v676 = vmul.f32 %v659, %v669
        %v677 = vmul.f32 %v661, %v673
        %v678 = vmul.f32 %v660, %v669
        %v679 = vmul.f32 %v662, %v673
        %680 = vrot.lane.b32.xlu0 %v466, 111
        %v681 = vpop.permute.xlu0 %680
        %682 = vrot.lane.b32.xlu0 %v459, 111
        %v683 = vpop.permute.xlu0 %682
        %684 = vrot.lane.b32.xlu0 %v467, 111
        %v685 = vpop.permute.xlu0 %684
        %686 = vrot.lane.b32.xlu0 %v461, 111
        %v687 = vpop.permute.xlu0 %686
        %vm688 = vcmp.lt.s32.totalorder %v478, 111
        %v689 = vsel %vm688, %v681, %v685
        %v690 = vsel %vm688, %v683, %v687
        %v691 = vsel %vm688, %v685, %v681
        %v692 = vsel %vm688, %v687, %v683
        %s693 = scalar_lea.vmem [#allocation7], 16
        %v694 = vld [vmem:[%s693] ss:$8 sm:$0x3]
        %v696 = vlaneseq
        %v697 = vshrl.u32 %v696, 7
        %v698 = vsub.s32 0, %v697
        %v699 = vrot.slane %v694, %v698
        %v700 = vlaneseq
        %v701 = vshrl.u32 %v700, 7
        %v702 = vsub.s32 1, %v701
        %v703 = vrot.slane %v694, %v702
        %v706 = vmul.f32 %v689, %v699
        %v707 = vmul.f32 %v691, %v703
        %v708 = vmul.f32 %v690, %v699
        %v709 = vmul.f32 %v692, %v703
        %v710 = vpack.c.bf16 %v498, %v496
        %v711 = vpack.c.bf16 %v499, %v497
        %v712 = vpack.c.bf16 %v528, %v526
        %v713 = vpack.c.bf16 %v529, %v527
        %v714 = vpack.c.bf16 %v558, %v556
        %v715 = vpack.c.bf16 %v559, %v557
        %v716 = vpack.c.bf16 %v588, %v586
        %v717 = vpack.c.bf16 %v589, %v587
        %v718 = vpack.c.bf16 %v459, %v466
        %v719 = vpack.c.bf16 %v461, %v467
        %v720 = vpack.c.bf16 %v618, %v616
        %v721 = vpack.c.bf16 %v619, %v617
        %v722 = vpack.c.bf16 %v648, %v646
        %v723 = vpack.c.bf16 %v649, %v647
        %v724 = vpack.c.bf16 %v678, %v676
        %v725 = vpack.c.bf16 %v679, %v677
        %v726 = vpack.c.bf16 %v708, %v706
        %v727 = vpack.c.bf16 %v709, %v707
        %v728 = vld [vmem:[%s5] sm:$0xff]
        %730 = vset.pattern.permute.xlu0 0
        %731 = vperm.xlu0 %730, %v728
        %v732 = vpop.permute.xlu0 %731
        %v735 = vunpack.c.l.b16 %v468
        %v736 = vunpack.c.h.b16 %v468
        %v737 = vpack.c.b16 %v735, %v735
        %v738 = vpack.c.b16 %v736, %v736
        %vm740 = vcmask 130048
        %v742 = vsel %vm740, %v738, 0
        %744 = vmatprep.subr.bf16.mxu0 %v711
        %745 = vmatpush1.bf16.msra.mxu0 %v710
        %746 = vmatprep.subr.bf16.mxu0 %v713
        %747 = vmatpush1.bf16.msra.mxu0 %v712
        %748 = vmatprep.subr.bf16.mxu0 %v715
        %749 = vmatpush1.bf16.msra.mxu0 %v714
        %750 = vmatprep.subr.bf16.mxu0 %v717
        %751 = vmatpush1.bf16.msra.mxu0 %v716
        %752 = vmatprep.subr.bf16.mxu0 %v719
        %753 = vmatpush1.bf16.msra.mxu0 %v718
        %754 = vmatprep.subr.bf16.mxu0 %v721
        %755 = vmatpush1.bf16.msra.mxu0 %v720
        %756 = vmatprep.subr.bf16.mxu0 %v723
        %757 = vmatpush1.bf16.msra.mxu0 %v722
        %758 = vmatprep.subr.bf16.mxu0 %v725
        %759 = vmatpush1.bf16.msra.mxu0 %v724
        %760 = vmatprep.subr.bf16.mxu0 %v727
        %761 = vmatpush1.bf16.msra.mxu0 %v726
        %762 = vmatprep.subr.bf16.mxu0 0
        %763 = vmatpush1.bf16.msra.mxu0 0
        %764 = vmatprep.subr.bf16.mxu0 0
        %765 = vmatpush1.bf16.msra.mxu0 0
        %766 = vmatprep.subr.bf16.mxu0 0
        %767 = vmatpush1.bf16.msra.mxu0 0
        %768 = vmatprep.subr.bf16.mxu0 0
        %769 = vmatpush1.bf16.msra.mxu0 0
        %770 = vmatprep.subr.bf16.mxu0 0
        %771 = vmatpush1.bf16.msra.mxu0 0
        %772 = vmatprep.subr.bf16.mxu0 0
        %773 = vmatpush1.bf16.msra.mxu0 0
        %774 = vmatprep.subr.bf16.mxu0 0
        %775 = vmatpush1.bf16.msra.mxu0 0
        %776 = vmatprep.mubr.bf16.mxu0 %v742
        %777 = vmatmul.mubr.bf16.gmra.mrb[0].mxu0 %v737
        %v778 = vpop.f32.mrb[0].mxu0
        %v779 = vadd.f32 %v732, %v778
        %v780 = vpop.f32.mrb[0].mxu0
        %v781 = vadd.f32 %v732, %v780
        %v782 = vpop.f32.mrb[0].mxu0
        %v783 = vpop.f32.mrb[0].mxu0
        %784 = vdwg.mxu0
        %vm785 = vcmp.gt.f32.partialorder %v779, 0.0
        %vm786 = vcmp.gt.f32.partialorder %v781, 0.0
        %v787 = vmin.f32 %v779, 0.0
        %v788 = vmin.f32 %v781, 0.0
        %v789 = vmul.f32 %v787, 1.442695
        %v790 = vpow.pop %v789
        %v791 = vmul.f32 %v788, 1.442695
        %v792 = vpow.pop %v791
        %v793 = vsub.f32 %v790, 1.0
        %v794 = vsub.f32 %v792, 1.0
        %v795 = vsel %vm785, %v779, %v793
        %v796 = vsel %vm786, %v781, %v794
        %v797 = vld [vmem:[%s6] sm:$0xf]
        %798 = vrot.lane.b32.xlu0 %v795, 17
        %v799 = vpop.permute.xlu0 %798
        %800 = vrot.lane.b32.xlu0 %v796, 17
        %v801 = vpop.permute.xlu0 %800
        %v802 = vsel %vm479, %v799, %v801
        %v803 = vsel %vm479, %v801, %v799
        %v804 = vmul.f32 %v803, %v489
        %v805 = vmul.f32 %v802, %v493
        %806 = vrot.lane.b32.xlu0 %v795, 16
        %v807 = vpop.permute.xlu0 %806
        %808 = vrot.lane.b32.xlu0 %v796, 16
        %v809 = vpop.permute.xlu0 %808
        %v810 = vsel %vm508, %v807, %v809
        %v811 = vsel %vm508, %v809, %v807
        %v812 = vmul.f32 %v811, %v519
        %v813 = vmul.f32 %v810, %v523
        %814 = vrot.lane.b32.xlu0 %v795, 15
        %v815 = vpop.permute.xlu0 %814
        %816 = vrot.lane.b32.xlu0 %v796, 15
        %v817 = vpop.permute.xlu0 %816
        %v818 = vsel %vm538, %v815, %v817
        %v819 = vsel %vm538, %v817, %v815
        %v820 = vmul.f32 %v819, %v549
        %v821 = vmul.f32 %v818, %v553
        %822 = vrot.lane.b32.xlu0 %v795, 1
        %v823 = vpop.permute.xlu0 %822
        %824 = vrot.lane.b32.xlu0 %v796, 1
        %v825 = vpop.permute.xlu0 %824
        %v826 = vsel %vm568, %v823, %v825
        %v827 = vsel %vm568, %v825, %v823
        %v828 = vmul.f32 %v827, %v579
        %v829 = vmul.f32 %v826, %v583
        %830 = vrot.lane.b32.xlu0 %v795, 127
        %v831 = vpop.permute.xlu0 %830
        %832 = vrot.lane.b32.xlu0 %v796, 127
        %v833 = vpop.permute.xlu0 %832
        %v834 = vsel %vm598, %v831, %v833
        %v835 = vsel %vm598, %v833, %v831
        %v836 = vmul.f32 %v834, %v609
        %v837 = vmul.f32 %v835, %v613
        %838 = vrot.lane.b32.xlu0 %v795, 113
        %v839 = vpop.permute.xlu0 %838
        %840 = vrot.lane.b32.xlu0 %v796, 113
        %v841 = vpop.permute.xlu0 %840
        %v842 = vsel %vm628, %v839, %v841
        %v843 = vsel %vm628, %v841, %v839
        %v844 = vmul.f32 %v842, %v639
        %v845 = vmul.f32 %v843, %v643
        %846 = vrot.lane.b32.xlu0 %v795, 112
        %v847 = vpop.permute.xlu0 %846
        %848 = vrot.lane.b32.xlu0 %v796, 112
        %v849 = vpop.permute.xlu0 %848
        %v850 = vsel %vm658, %v847, %v849
        %v851 = vsel %vm658, %v849, %v847
        %v852 = vmul.f32 %v850, %v669
        %v853 = vmul.f32 %v851, %v673
        %854 = vrot.lane.b32.xlu0 %v795, 111
        %v855 = vpop.permute.xlu0 %854
        %856 = vrot.lane.b32.xlu0 %v796, 111
        %v857 = vpop.permute.xlu0 %856
        %v858 = vsel %vm688, %v855, %v857
        %v859 = vsel %vm688, %v857, %v855
        %v860 = vmul.f32 %v858, %v699
        %v861 = vmul.f32 %v859, %v703
        %v862 = vpack.c.bf16 %v812, %v804
        %v863 = vpack.c.bf16 %v813, %v805
        %v864 = vpack.c.bf16 %v828, %v820
        %v865 = vpack.c.bf16 %v829, %v821
        %v866 = vpack.c.bf16 %v836, %v795
        %v867 = vpack.c.bf16 %v837, %v796
        %v868 = vpack.c.bf16 %v852, %v844
        %v869 = vpack.c.bf16 %v853, %v845
        %v870 = vpack.c.bf16 %v860, %v860
        %v871 = vpack.c.bf16 %v861, %v861
        %v872 = vld [vmem:[%s7] sm:$0xff]
        %874 = vset.pattern.permute.xlu0 0
        %875 = vperm.xlu0 %874, %v872
        %v876 = vpop.permute.xlu0 %875
        %vm878 = vcmask 588800
        %v880 = vsel %vm878, %v797, 0
        %vm882 = vcmask 1043456
        %v884 = vsel %vm882, %v870, 0
        %v887 = vsel %vm882, %v871, 0
        %889 = vmatprep.subr.bf16.mxu0 %v863
        %890 = vmatpush1.bf16.msra.mxu0 %v862
        %891 = vmatprep.subr.bf16.mxu0 %v865
        %892 = vmatpush1.bf16.msra.mxu0 %v864
        %893 = vmatprep.subr.bf16.mxu0 %v867
        %894 = vmatpush1.bf16.msra.mxu0 %v866
        %895 = vmatprep.subr.bf16.mxu0 %v869
        %896 = vmatpush1.bf16.msra.mxu0 %v868
        %897 = vmatprep.subr.bf16.mxu0 %v887
        %898 = vmatpush1.bf16.msra.mxu0 %v884
        %899 = vmatprep.subr.bf16.mxu0 0
        %900 = vmatpush1.bf16.msra.mxu0 0
        %901 = vmatprep.subr.bf16.mxu0 0
        %902 = vmatpush1.bf16.msra.mxu0 0
        %903 = vmatprep.subr.bf16.mxu0 0
        %904 = vmatpush1.bf16.msra.mxu0 0
        %905 = vmatprep.subr.bf16.mxu0 0
        %906 = vmatpush1.bf16.msra.mxu0 0
        %907 = vmatprep.subr.bf16.mxu0 0
        %908 = vmatpush1.bf16.msra.mxu0 0
        %909 = vmatprep.subr.bf16.mxu0 0
        %910 = vmatpush1.bf16.msra.mxu0 0
        %911 = vmatprep.subr.bf16.mxu0 0
        %912 = vmatpush1.bf16.msra.mxu0 0
        %913 = vmatprep.subr.bf16.mxu0 0
        %914 = vmatpush1.bf16.msra.mxu0 0
        %915 = vmatprep.subr.bf16.mxu0 0
        %916 = vmatpush1.bf16.msra.mxu0 0
        %917 = vmatprep.subr.bf16.mxu0 0
        %918 = vmatpush1.bf16.msra.mxu0 0
        %919 = vmatprep.subr.bf16.mxu0 0
        %920 = vmatpush1.bf16.msra.mxu0 0
        %921 = vmatprep.mubr.bf16.mxu0 0
        %922 = vmatmul.mubr.bf16.gmra.mrb[0].mxu0 %v880
        %v923 = vpop.f32.mrb[0].mxu0
        %v924 = vadd.f32 %v876, %v923
        %v925 = vpop.f32.mrb[0].mxu0
        %v926 = vadd.f32 %v876, %v925
        %v927 = vpop.f32.mrb[0].mxu0
        %v928 = vpop.f32.mrb[0].mxu0
        %929 = vdwg.mxu0
        %vm930 = vcmp.gt.f32.partialorder %v924, 0.0
        %vm931 = vcmp.gt.f32.partialorder %v926, 0.0
        %v932 = vmin.f32 %v924, 0.0
        %v933 = vmin.f32 %v926, 0.0
        %v934 = vmul.f32 %v932, 1.442695
        %v935 = vpow.pop %v934
        %v936 = vmul.f32 %v933, 1.442695
        %v937 = vpow.pop %v936
        %v938 = vsub.f32 %v935, 1.0
        %v939 = vsub.f32 %v937, 1.0
        %v940 = vsel %vm930, %v924, %v938
        %v941 = vsel %vm931, %v926, %v939
        %v942 = vpack.c.bf16 %v940, %v940
        %v943 = vpack.c.bf16 %v941, %v941
        %v946 = vunpack.c.l.b16 %v942
        %v947 = vunpack.c.l.b16 %v943
        %v948 = vpack.c.b16 %v947, %v946
        %950 = vst [vmem:[%s364] sm:$0xff] %v948
        %s951 = sand.u32 %s212, 1
        %s952 = scalar_lea.sflag [#allocation4], %s951
        %s953 = sand.u32 %s212, 1
        %s954 = smul.addr %s953, 8
        %s955 = scalar_lea.vmem [#allocation8], %s954
        // Predicated region
        $region65: #{tpu_custom_call.1} parent=51 // pred_check
          %p956 = pneg %p222
        $region66: #{tpu_custom_call.1} parent=51 // pred_check_branch
          %958 = sbr.rel (%p956) target = $region68
        $region67: #{tpu_custom_call.1} parent=51 // pred_region
          %s960 = ssub.s32 128, 128
          %961 = vsyncadd %s952, %s960
          %s962 = smul.addr %s26, 2
          %s963 = smul.addr %s962, 64
          %s964 = scalar_lea.hbm %s8, %s963
          %s966 = sshll.u32 %s955, 4
          %s967 = int_to_ptr.vmem [resolvable:$true] %s966
          %969 = dma.vmem_to_hbm [thread:$0]  %s967, 128, %s964, %s952
        $region68: #{tpu_custom_call.1} parent=51 // pred_fallthru
          _
      $region52: #{tpu_custom_call.1} parent=5 // pred_fallthru
        _
      %p970 = scmp.le.s32.totalorder 2, %s21
      // Predicated region
      $region69: #{tpu_custom_call.1} parent=5 // pred_check
        %p971 = pneg %p970
      $region70: #{tpu_custom_call.1} parent=5 // pred_check_branch
        %973 = sbr.rel (%p971) target = $region72
      $region71: #{tpu_custom_call.1} parent=5 // pred_region
        %s974 = ssub.s32 %s21, 2
        // Predicated region
        $region73: #{tpu_custom_call.1} parent=71 // pred_check
          %p975 = pneg %p228
        $region74: #{tpu_custom_call.1} parent=71 // pred_check_branch
          %977 = sbr.rel (%p975) target = $region76
        $region75: #{tpu_custom_call.1} parent=71 // pred_region
          %s978 = sand.u32 %s213, 1
          %s979 = scalar_lea.sflag [#allocation4], %s978
          %s980 = sand.u32 %s213, 1
          %s981 = smul.addr %s980, 8
          %s982 = scalar_lea.vmem [#allocation8], %s981
          %983 = dma.done %s979, 128
        $region76: #{tpu_custom_call.1} parent=71 // pred_fallthru
          _
      $region72: #{tpu_custom_call.1} parent=5 // pred_fallthru
        _
    $region6: #{tpu_custom_call.1} parent=1 // loop_footer
      %s25 = sadd.s32 1, %s21
    $region7: #{tpu_custom_call.1} parent=1 // loop_footer_branch
      %20 = sbr.rel target = $region3
    $region8: #{tpu_custom_call.1} parent=1 // loop_exit
      _
    %984 = vsyncpa [#allocation3], 1
    %s985 = scalar_lea.sflag [#allocation3], 1
    %986 = vsyncpa %s985, 1
    %987 = vsyncpa [#allocation6], 1
    %988 = vsyncpa [#allocation4], 1
    %s989 = scalar_lea.sflag [#allocation4], 1
    %990 = vsyncpa %s989, 1

</llo_original>
